<compile_context>
chip_gen: v7x
topology: tpu7x:2x2x1
jax: 0.10.0
libtpu: 0.0.40
codegen_flags: <defaults>
</compile_context>

<pallas_src>
import functools
import math

import jax
import jax.numpy as jnp
import numpy as np
from jax import lax
from jax.experimental import pallas as pl
from jax.experimental.pallas import tpu as pltpu

_CHUNK = 1024  # packed rows per in-kernel chunk (bounds intermediate VMEM/vregs)


def _round_up(a, b):
    return (a + b - 1) // b * b


def _decoder_kernel(xp_ref, bd_ref, b1_ref, s_ref, b2_ref, o_ref, *, precision):
    # xp_ref: (TMg, 128) packed input rows (P original rows per packed row)
    # bd_ref: (128, 128) kron(I_P, W1^T)         (x dtype)
    # b1_ref: (1, 128)   b1 tiled P times        (f32)
    # s_ref : (128, P)   kron(I_P, W2^T)         (f32)
    # b2_ref: (1,)       second Linear bias      (f32, SMEM)
    # o_ref : (TMg, P)   one output scalar per original row
    tmg = xp_ref.shape[0]
    chunk = min(_CHUNK, tmg)

    bd = bd_ref[...]
    b1t = b1_ref[...]
    smat = s_ref[...]
    b2 = b2_ref[0]

    def compute(row0, nrows):
        xc = xp_ref[pl.ds(row0, nrows), :]
        h = jnp.dot(xc, bd, preferred_element_type=jnp.float32, precision=precision)
        h = jnp.maximum(h + b1t, 0.0)
        # Small matmul (K=128, N=P): HIGHEST keeps the f32 accumulator exact.
        y = jnp.dot(h, smat, preferred_element_type=jnp.float32,
                    precision=lax.Precision.HIGHEST) + b2
        o_ref[pl.ds(row0, nrows), :] = y.astype(o_ref.dtype)

    n_full = tmg // chunk
    rem = tmg - n_full * chunk
    if n_full == 1:
        compute(0, chunk)
    elif n_full > 1:
        def body(c, carry):
            compute(pl.multiple_of(c * chunk, chunk), chunk)
            return carry
        lax.fori_loop(0, n_full, body, 0)
    if rem > 0:
        compute(n_full * chunk, rem)


def decoder_small_deepset(x, w1, b1, w2, b2, *, block_rows=131072, precision=None):
    """Pallas TPU implementation of DecoderSmallDeepSet.forward.

    x : (..., F);  w1 : (F, F), b1 : (F,)   -- nn.Linear(F, F)
    w2 : (1, F),   b2 : (1,)                -- nn.Linear(F, 1)
    Returns (..., 1) in x.dtype.
    """
    F = w1.shape[0]
    assert w1.shape == (F, F) and b1.shape == (F,)
    assert w2.shape == (1, F) and b2.shape == (1,)
    # Lane-packing assumes F divides 128 (true for the module's default F=8).
    assert 128 % F == 0, "TODO(synk): general outFeatures needs an un-packed fallback"
    P = 128 // F
    W = P * F  # = 128

    lead_shape = x.shape[:-1]
    n_rows = math.prod(lead_shape) if lead_shape else 1
    dt = x.dtype  # keep HBM traffic at input precision (bf16 stays bf16)
    sz = jnp.dtype(dt).itemsize

    x2d = x.reshape(n_rows, F)
    rem_rows = n_rows % P
    if rem_rows:
        # Minimal pad (only when rows % 16 != 0); aligned inputs take the
        # zero-copy reshape below and never touch jnp.pad.
        x2d = jnp.pad(x2d, ((0, P - rem_rows), (0, 0)))
    n_rows_p = x2d.shape[0]
    n_packed = n_rows_p // P
    xp = x2d.reshape(n_packed, W)  # free: rows are contiguous row-major

    # ---- choose the row tile (in packed rows), capped by this chip's VMEM ----
    try:
        vmem_cap = int(pltpu.get_tpu_info().vmem_capacity_bytes)
    except Exception:
        vmem_cap = 64 << 20  # conservative (v7x per-core VMEM)
    per_prow = W * sz * 4  # 2 x-buffers + 2 (lane-padded) out-buffers per packed row
    tmg_cap = max(8, int(vmem_cap * 0.4) // per_prow)
    tmg = min(max(8, block_rows // P), tmg_cap)
    if n_packed <= tmg:
        if n_packed >= 2 * _CHUNK:
            # Split mid-size inputs into two tiles so ("parallel",) can use
            # both TensorCores on v7x.
            tmg = _round_up(pl.cdiv(n_packed, 2), _CHUNK)
        else:
            tmg = n_packed  # single exact tile
    elif tmg >= _CHUNK:
        tmg = (tmg // _CHUNK) * _CHUNK
    else:
        tmg = max(8, (tmg // 8) * 8)
    n_tiles = pl.cdiv(n_packed, tmg)  # last tile may be partial (Pallas clamps)

    # ---- constant operands (resident in VMEM across grid steps) -------------
    eye = jnp.eye(P, dtype=jnp.float32)
    bd = jnp.kron(eye, w1.T.astype(jnp.float32)).astype(dt)      # (128, 128)
    b1t = jnp.tile(b1.astype(jnp.float32), P).reshape(1, W)      # (1, 128) f32
    smat = jnp.kron(eye, w2.astype(jnp.float32).reshape(F, 1))   # (128, P) f32
    b2s = b2.reshape(1).astype(jnp.float32)                      # SMEM scalar

    # ---- VMEM budget & cost hint ---------------------------------------------
    blk_bytes = tmg * W * sz
    chunk_bytes = min(_CHUNK, tmg) * W * 4
    vmem_need = 4 * blk_bytes + 12 * chunk_bytes + (4 << 20)
    vmem_limit = int(min(vmem_cap * 0.85, max(vmem_need, 32 << 20)))

    cost = pl.CostEstimate(
        flops=2 * n_packed * W * (W + P),
        transcendentals=0,
        bytes_accessed=n_packed * W * sz + n_packed * P * sz + 3 * W * W * 4,
    )

    kernel = functools.partial(_decoder_kernel, precision=precision)

    out = pl.pallas_call(
        kernel,
        out_shape=jax.ShapeDtypeStruct((n_packed, P), dt),
        grid_spec=pltpu.PrefetchScalarGridSpec(
            num_scalar_prefetch=0,
            grid=(n_tiles,),
            in_specs=[
                pl.BlockSpec((tmg, W), lambda i: (i, 0)),            # x rows (tiled)
                pl.BlockSpec((W, W), lambda i: (0, 0)),              # kron(I, W1^T), resident
                pl.BlockSpec((1, W), lambda i: (0, 0)),              # b1 tiled, resident
                pl.BlockSpec((W, P), lambda i: (0, 0)),              # kron(I, W2^T), resident
                pl.BlockSpec(memory_space=pltpu.MemorySpace.SMEM),   # b2 scalar
            ],
            out_specs=pl.BlockSpec((tmg, P), lambda i: (i, 0)),
        ),
        compiler_params=pltpu.CompilerParams(
            dimension_semantics=("parallel",),  # row tiles are independent
            vmem_limit_bytes=vmem_limit,
        ),
        cost_estimate=cost,
    )(xp, bd, b1t, smat, b2s)

    out_rows = out.reshape(n_rows_p)[:n_rows]
    return out_rows.reshape(*lead_shape, 1)


def _reference_np(x, w1, b1, w2, b2):
    x64 = np.asarray(x, dtype=np.float64)
    h = np.maximum(x64 @ np.asarray(w1, np.float64).T + np.asarray(b1, np.float64), 0.0)
    return h @ np.asarray(w2, np.float64).T + np.asarray(b2, np.float64)


if __name__ == "__main__":
    out_features = 8          # DecoderSmallDeepSet(outFeatures=8)
    batch, seq = 2, 8         # x: (2, 8, 8)

    key = jax.random.PRNGKey(0)
    kx, kw1, kb1, kw2, kb2 = jax.random.split(key, 5)

    def q(a):  # bf16-representable values -> exact products on any MXU precision mode
        return a.astype(jnp.bfloat16).astype(jnp.float32)

    bound = 1.0 / (out_features ** 0.5)
    x = q(jax.random.normal(kx, (batch, seq, out_features), dtype=jnp.float32))
    w1 = q(jax.random.uniform(kw1, (out_features, out_features),
                              minval=-bound, maxval=bound, dtype=jnp.float32))
    b1 = q(jax.random.uniform(kb1, (out_features,),
                              minval=-bound, maxval=bound, dtype=jnp.float32))
    w2 = q(jax.random.uniform(kw2, (1, out_features),
                              minval=-bound, maxval=bound, dtype=jnp.float32))
    b2 = q(jax.random.uniform(kb2, (1,),
                              minval=-bound, maxval=bound, dtype=jnp.float32))

    out = jax.block_until_ready(decoder_small_deepset(x, w1, b1, w2, b2))
    assert out.shape == (batch, seq, 1), out.shape
    ref = _reference_np(np.asarray(x).reshape(-1, out_features),
                        w1, b1, w2, b2).reshape(batch, seq, 1)
    assert np.allclose(np.asarray(out, np.float64), ref, atol=1e-4, rtol=1e-4), \
        "mismatch vs reference (single tile)"

    # Multi-tile + partial last tile + ragged (rows % 16 != 0) path:
    # 3*700 = 2100 rows -> 132 packed rows; block_rows=2048 -> 128-packed-row
    # tiles -> 2 grid steps, second one partial (boundary-clamped).
    x_big = q(jax.random.normal(jax.random.PRNGKey(1), (3, 700, out_features),
                                dtype=jnp.float32))
    out_big = jax.block_until_ready(
        decoder_small_deepset(x_big, w1, b1, w2, b2, block_rows=2048))
    assert out_big.shape == (3, 700, 1), out_big.shape
    ref_big = _reference_np(np.asarray(x_big).reshape(-1, out_features),
                            w1, b1, w2, b2).reshape(3, 700, 1)
    assert np.allclose(np.asarray(out_big, np.float64), ref_big, atol=1e-4, rtol=1e-4), \
        "mismatch vs reference (tiled + partial tile + ragged)"

    print("KERNEL_OK")
</pallas_src>

<mosaic_0001>
module attributes {stable_mosaic.version = 11 : i64} {
  func.func @_decoder_kernel(%arg0: i32, %arg1: memref<1x128xf32, #tpu.memory_space<vmem>>, %arg2: memref<128x128xf32, #tpu.memory_space<vmem>>, %arg3: memref<1x128xf32, #tpu.memory_space<vmem>>, %arg4: memref<128x16xf32, #tpu.memory_space<vmem>>, %arg5: memref<1xf32, #tpu.memory_space<smem>>, %arg6: memref<1x16xf32, #tpu.memory_space<vmem>>) attributes {dimension_semantics = [#tpu.dimension_semantics<parallel>], iteration_bounds = array<i64: 1>, scalar_prefetch = 0 : i64, scratch_operands = 0 : i64, tpu.core_type = #tpu.core_type<tc>, window_params = [{transform_indices = @transform_0, window_bounds = array<i64: 1, 128>}, {pipeline_mode = #tpu.pipeline_mode<synchronous>, transform_indices = @transform_1, window_bounds = array<i64: 128, 128>}, {pipeline_mode = #tpu.pipeline_mode<synchronous>, transform_indices = @transform_2, window_bounds = array<i64: 1, 128>}, {pipeline_mode = #tpu.pipeline_mode<synchronous>, transform_indices = @transform_3, window_bounds = array<i64: 128, 16>}, {transform_indices = @transform_4, window_bounds = array<i64: 1>}, {transform_indices = @transform_5, window_bounds = array<i64: 1, 16>}]} {
    %c0 = arith.constant 0 : index
    %c0_0 = arith.constant 0 : index
    %0 = vector.load %arg2[%c0, %c0_0] : memref<128x128xf32, #tpu.memory_space<vmem>>, vector<128x128xf32>
    %c0_1 = arith.constant 0 : index
    %c0_2 = arith.constant 0 : index
    %1 = vector.load %arg3[%c0_1, %c0_2] : memref<1x128xf32, #tpu.memory_space<vmem>>, vector<1x128xf32>
    %c0_3 = arith.constant 0 : index
    %c0_4 = arith.constant 0 : index
    %2 = vector.load %arg4[%c0_3, %c0_4] : memref<128x16xf32, #tpu.memory_space<vmem>>, vector<128x16xf32>
    %c0_5 = arith.constant 0 : index
    %3 = memref.load %arg5[%c0_5] : memref<1xf32, #tpu.memory_space<smem>>
    %c0_6 = arith.constant 0 : index
    %c0_7 = arith.constant 0 : index
    %4 = vector.load %arg1[%c0_6, %c0_7] : memref<1x128xf32, #tpu.memory_space<vmem>>, vector<1x128xf32>
    %cst = arith.constant dense<0.000000e+00> : vector<1x128xf32>
    %5 = tpu.matmul %4, %0, %cst {dimension_numbers = #tpu.dot_dimension_numbers<[1], [0], [0], [1], [0, 0, 1, 1], [], []>} : vector<1x128xf32>, vector<128x128xf32>, vector<1x128xf32> -> vector<1x128xf32>
    %6 = arith.addf %5, %1 : vector<1x128xf32>
    %cst_8 = arith.constant 0.000000e+00 : f32
    %7 = vector.broadcast %cst_8 : f32 to vector<1x128xf32>
    %8 = arith.maximumf %6, %7 : vector<1x128xf32>
    %cst_9 = arith.constant dense<0.000000e+00> : vector<1x16xf32>
    %9 = tpu.matmul %8, %2, %cst_9 {dimension_numbers = #tpu.dot_dimension_numbers<[1], [0], [0], [1], [0, 0, 1, 1], [], []>, precision = #tpu.contract_precision<fp32>} : vector<1x128xf32>, vector<128x16xf32>, vector<1x16xf32> -> vector<1x16xf32>
    %10 = vector.broadcast %3 : f32 to vector<1x16xf32>
    %11 = arith.addf %9, %10 : vector<1x16xf32>
    %c0_10 = arith.constant 0 : index
    %c0_11 = arith.constant 0 : index
    %12 = vector.load %arg6[%c0_10, %c0_11] : memref<1x16xf32, #tpu.memory_space<vmem>>, vector<1x16xf32>
    tpu.vector_store %arg6[%c0_10, %c0_11], %11 {strides = array<i32>} : memref<1x16xf32, #tpu.memory_space<vmem>>, vector<1x16xf32>,
    return
  }
  func.func @transform_0(%arg0: i32) -> (i32, i32) {
    %c0_i32 = arith.constant 0 : i32
    %c0_i32_0 = arith.constant 0 : i32
    return %arg0, %c0_i32 : i32, i32
  }
  func.func @transform_1(%arg0: i32) -> (i32, i32) {
    %c0_i32 = arith.constant 0 : i32
    %c0_i32_0 = arith.constant 0 : i32
    %c0_i32_1 = arith.constant 0 : i32
    return %c0_i32, %c0_i32_0 : i32, i32
  }
  func.func @transform_2(%arg0: i32) -> (i32, i32) {
    %c0_i32 = arith.constant 0 : i32
    %c0_i32_0 = arith.constant 0 : i32
    %c0_i32_1 = arith.constant 0 : i32
    return %c0_i32, %c0_i32_0 : i32, i32
  }
  func.func @transform_3(%arg0: i32) -> (i32, i32) {
    %c0_i32 = arith.constant 0 : i32
    %c0_i32_0 = arith.constant 0 : i32
    %c0_i32_1 = arith.constant 0 : i32
    return %c0_i32, %c0_i32_0 : i32, i32
  }
  func.func @transform_4(%arg0: i32) -> i32 {
    %c0_i32 = arith.constant 0 : i32
    %c0_i32_0 = arith.constant 0 : i32
    return %c0_i32 : i32
  }
  func.func @transform_5(%arg0: i32) -> (i32, i32) {
    %c0_i32 = arith.constant 0 : i32
    %c0_i32_0 = arith.constant 0 : i32
    return %arg0, %c0_i32 : i32, i32
  }
}

</mosaic_0001>

<llo_original>
// kernel: tpu_custom_call.1
$region0: #{tpu_custom_call.1}
  #allocation0 [shape = 'u32[]', space=smem, size = 0x4, offset = 0x4, fixed_abs, tag = 'smem constant byte address 0x4 - core index']
  #allocation1 [shape = 'u32[144,128]{1,0:T(1,128)}', space=vmem, size = 0x12000, scoped, tag = 'internal scratch']
  #allocation2 [shape = 'f32[1]{0:T(128)S(6)}', space=smem, size = 0x200, scoped, tag = 'scoped memory for tpu_custom_call.1']
  %s0 = inlined_call_operand.vmem [shape: f32[1,128], index: 0, kind: input, shape index: {}]
  %s1 = inlined_call_operand.vmem [shape: f32[128,128], index: 1, kind: input, shape index: {}]
  %s2 = inlined_call_operand.vmem [shape: f32[1,128], index: 2, kind: input, shape index: {}]
  %s3 = inlined_call_operand.vmem [shape: f32[128,16], index: 3, kind: input, shape index: {}]
  %s4 = inlined_call_operand.<no memory space> [shape: f32[1], index: 4, kind: input, shape index: {}]
  %s5 = inlined_call_operand.hbm [shape: f32[1,16], index: 5, kind: output, shape index: {}]
  %s6 = sld [smem:[#allocation0]]
  $region30: #{tpu_custom_call.1} parent=0
    _
  %s8 = ssub.s32 1, %s6
  %s9 = scalar_select 0, %s8, %s6
  %10 = sst [smem:[#allocation2]] %s4
  $region1: #{tpu_custom_call.1} parent=0
    #allocation3 [shape = 'u8[512]{0}', space=vmem, size = 0x400, scoped, tag = 'output window, operand 0, single buffered']
    #allocation4 [shape = 's32[1]{0}', space=sflag, size = 0x4, scoped, tag = 'scoped memory for tpu_custom_call.1']
    %11 = vsyncpa [#allocation4], 0
    // Predicated region
    $region2: #{tpu_custom_call.1} parent=1 // pred_check
      _
    $region3: #{tpu_custom_call.1} parent=1 // pred_check_branch
      %13 = sbr.rel (0) target = $region5
    $region4: #{tpu_custom_call.1} parent=1 // pred_region
      _
    $region5: #{tpu_custom_call.1} parent=1 // pred_fallthru
      _
    // Predicated region
    $region6: #{tpu_custom_call.1} parent=1 // pred_check
      _
    $region7: #{tpu_custom_call.1} parent=1 // pred_check_branch
      %15 = sbr.rel (0) target = $region9
    $region8: #{tpu_custom_call.1} parent=1 // pred_region
      _
    $region9: #{tpu_custom_call.1} parent=1 // pred_fallthru
      _
    // Predicated region
    $region10: #{tpu_custom_call.1} parent=1 // pred_check
      _
    $region11: #{tpu_custom_call.1} parent=1 // pred_check_branch
      %17 = sbr.rel (0) target = $region13
    $region12: #{tpu_custom_call.1} parent=1 // pred_region
      _
    $region13: #{tpu_custom_call.1} parent=1 // pred_fallthru
      _
    // Predicated region
    $region14: #{tpu_custom_call.1} parent=1 // pred_check
      _
    $region15: #{tpu_custom_call.1} parent=1 // pred_check_branch
      %19 = sbr.rel (0) target = $region17
    $region16: #{tpu_custom_call.1} parent=1 // pred_region
      _
    $region17: #{tpu_custom_call.1} parent=1 // pred_fallthru
      _
    // Predicated region
    $region18: #{tpu_custom_call.1} parent=1 // pred_check
      _
    $region19: #{tpu_custom_call.1} parent=1 // pred_check_branch
      %21 = sbr.rel (0) target = $region21
    $region20: #{tpu_custom_call.1} parent=1 // pred_region
      _
    $region21: #{tpu_custom_call.1} parent=1 // pred_fallthru
      _
    %v22 = vld [vmem:[%s1] sm:$0xff]
    %v23 = vld [vmem:[%s1 + $0x8] sm:$0xff]
    %v24 = vld [vmem:[%s1 + $0x10] sm:$0xff]
    %v25 = vld [vmem:[%s1 + $0x18] sm:$0xff]
    %v26 = vld [vmem:[%s1 + $0x20] sm:$0xff]
    %v27 = vld [vmem:[%s1 + $0x28] sm:$0xff]
    %v28 = vld [vmem:[%s1 + $0x30] sm:$0xff]
    %v29 = vld [vmem:[%s1 + $0x38] sm:$0xff]
    %v30 = vld [vmem:[%s1 + $0x40] sm:$0xff]
    %v31 = vld [vmem:[%s1 + $0x48] sm:$0xff]
    %v32 = vld [vmem:[%s1 + $0x50] sm:$0xff]
    %v33 = vld [vmem:[%s1 + $0x58] sm:$0xff]
    %v34 = vld [vmem:[%s1 + $0x60] sm:$0xff]
    %v35 = vld [vmem:[%s1 + $0x68] sm:$0xff]
    %v36 = vld [vmem:[%s1 + $0x70] sm:$0xff]
    %v37 = vld [vmem:[%s1 + $0x78] sm:$0xff]
    %v38 = vld [vmem:[%s2] sm:$0x1]
    %v39 = vld [vmem:[%s3] sm:$0xff]
    %v40 = vld [vmem:[%s3 + $0x8] sm:$0xff]
    %v41 = vld [vmem:[%s3 + $0x10] sm:$0xff]
    %v42 = vld [vmem:[%s3 + $0x18] sm:$0xff]
    %v43 = vld [vmem:[%s3 + $0x20] sm:$0xff]
    %v44 = vld [vmem:[%s3 + $0x28] sm:$0xff]
    %v45 = vld [vmem:[%s3 + $0x30] sm:$0xff]
    %v46 = vld [vmem:[%s3 + $0x38] sm:$0xff]
    %v47 = vld [vmem:[%s3 + $0x40] sm:$0xff]
    %v48 = vld [vmem:[%s3 + $0x48] sm:$0xff]
    %v49 = vld [vmem:[%s3 + $0x50] sm:$0xff]
    %v50 = vld [vmem:[%s3 + $0x58] sm:$0xff]
    %v51 = vld [vmem:[%s3 + $0x60] sm:$0xff]
    %v52 = vld [vmem:[%s3 + $0x68] sm:$0xff]
    %v53 = vld [vmem:[%s3 + $0x70] sm:$0xff]
    %v54 = vld [vmem:[%s3 + $0x78] sm:$0xff]
    %s55 = sld [smem:[#allocation2]]
    %v56 = vld [vmem:[%s0] sm:$0x1]
    %57 = vmatprep.subr.mxu0 0.0
    %58 = vmatpush1.msra.mxu0 %v22
    %59 = vmatprep.subr.mxu0 0.0
    %60 = vmatpush1.msra.mxu0 %v23
    %61 = vmatprep.subr.mxu0 0.0
    %62 = vmatpush1.msra.mxu0 %v24
    %63 = vmatprep.subr.mxu0 0.0
    %64 = vmatpush1.msra.mxu0 %v25
    %65 = vmatprep.subr.mxu0 0.0
    %66 = vmatpush1.msra.mxu0 %v26
    %67 = vmatprep.subr.mxu0 0.0
    %68 = vmatpush1.msra.mxu0 %v27
    %69 = vmatprep.subr.mxu0 0.0
    %70 = vmatpush1.msra.mxu0 %v28
    %71 = vmatprep.subr.mxu0 0.0
    %72 = vmatpush1.msra.mxu0 %v29
    %73 = vmatprep.subr.mxu0 0.0
    %74 = vmatpush1.msra.mxu0 %v30
    %75 = vmatprep.subr.mxu0 0.0
    %76 = vmatpush1.msra.mxu0 %v31
    %77 = vmatprep.subr.mxu0 0.0
    %78 = vmatpush1.msra.mxu0 %v32
    %79 = vmatprep.subr.mxu0 0.0
    %80 = vmatpush1.msra.mxu0 %v33
    %81 = vmatprep.subr.mxu0 0.0
    %82 = vmatpush1.msra.mxu0 %v34
    %83 = vmatprep.subr.mxu0 0.0
    %84 = vmatpush1.msra.mxu0 %v35
    %85 = vmatprep.subr.mxu0 0.0
    %86 = vmatpush1.msra.mxu0 %v36
    %87 = vmatprep.subr.mxu0 0.0
    %88 = vmatpush1.msra.mxu0 %v37
    %89 = vmatprep.subr.mxu0 0.0
    %90 = vmatpush1.msra.mxu0 0.0
    %91 = vmatprep.subr.mxu0 0.0
    %92 = vmatpush1.msra.mxu0 0.0
    %93 = vmatprep.subr.mxu0 0.0
    %94 = vmatpush1.msra.mxu0 0.0
    %95 = vmatprep.subr.mxu0 0.0
    %96 = vmatpush1.msra.mxu0 0.0
    %97 = vmatprep.subr.mxu0 0.0
    %98 = vmatpush1.msra.mxu0 0.0
    %99 = vmatprep.subr.mxu0 0.0
    %100 = vmatpush1.msra.mxu0 0.0
    %101 = vmatprep.subr.mxu0 0.0
    %102 = vmatpush1.msra.mxu0 0.0
    %103 = vmatprep.subr.mxu0 0.0
    %104 = vmatpush1.msra.mxu0 0.0
    %105 = vmatprep.subr.mxu0 0.0
    %106 = vmatpush1.msra.mxu0 0.0
    %107 = vmatprep.subr.mxu0 0.0
    %108 = vmatpush1.msra.mxu0 0.0
    %109 = vmatprep.subr.mxu0 0.0
    %110 = vmatpush1.msra.mxu0 0.0
    %111 = vmatprep.subr.mxu0 0.0
    %112 = vmatpush1.msra.mxu0 0.0
    %113 = vmatprep.subr.mxu0 0.0
    %114 = vmatpush1.msra.mxu0 0.0
    %115 = vmatprep.subr.mxu0 0.0
    %116 = vmatpush1.msra.mxu0 0.0
    %117 = vmatprep.subr.mxu0 0.0
    %118 = vmatpush1.msra.mxu0 0.0
    %119 = vmatprep.subr.mxu0 0.0
    %120 = vmatpush1.msra.mxu0 0.0
    %121 = vmatprep.mubr.f32.mxu0 0.0
    %122 = vmatmul.mubr.f32.gmra.mrb[0].mxu0 %v56
    %v123 = vpop.f32.mrb[0].mxu0
    %v124 = vadd.f32 %v38, %v123
    %v125 = vpop.f32.mrb[0].mxu0
    %126 = vdwg.mxu0
    %v127 = vmax.f32 %v124, 0.0
    %v128 = vstv %s55
    %129 = vmatprep.subr.mxu0 0.0
    %v130 = vand.u32 %v39, 4294901760
    %131 = vmatpush1.msra.mxu0 %v130
    %132 = vmatprep.subr.mxu0 0.0
    %v133 = vand.u32 %v40, 4294901760
    %134 = vmatpush1.msra.mxu0 %v133
    %135 = vmatprep.subr.mxu0 0.0
    %v136 = vand.u32 %v41, 4294901760
    %137 = vmatpush1.msra.mxu0 %v136
    %138 = vmatprep.subr.mxu0 0.0
    %v139 = vand.u32 %v42, 4294901760
    %140 = vmatpush1.msra.mxu0 %v139
    %141 = vmatprep.subr.mxu0 0.0
    %v142 = vand.u32 %v43, 4294901760
    %143 = vmatpush1.msra.mxu0 %v142
    %144 = vmatprep.subr.mxu0 0.0
    %v145 = vand.u32 %v44, 4294901760
    %146 = vmatpush1.msra.mxu0 %v145
    %147 = vmatprep.subr.mxu0 0.0
    %v148 = vand.u32 %v45, 4294901760
    %149 = vmatpush1.msra.mxu0 %v148
    %150 = vmatprep.subr.mxu0 0.0
    %v151 = vand.u32 %v46, 4294901760
    %152 = vmatpush1.msra.mxu0 %v151
    %153 = vmatprep.subr.mxu0 0.0
    %v154 = vand.u32 %v47, 4294901760
    %155 = vmatpush1.msra.mxu0 %v154
    %156 = vmatprep.subr.mxu0 0.0
    %v157 = vand.u32 %v48, 4294901760
    %158 = vmatpush1.msra.mxu0 %v157
    %159 = vmatprep.subr.mxu0 0.0
    %v160 = vand.u32 %v49, 4294901760
    %161 = vmatpush1.msra.mxu0 %v160
    %162 = vmatprep.subr.mxu0 0.0
    %v163 = vand.u32 %v50, 4294901760
    %164 = vmatpush1.msra.mxu0 %v163
    %165 = vmatprep.subr.mxu0 0.0
    %v166 = vand.u32 %v51, 4294901760
    %167 = vmatpush1.msra.mxu0 %v166
    %168 = vmatprep.subr.mxu0 0.0
    %v169 = vand.u32 %v52, 4294901760
    %170 = vmatpush1.msra.mxu0 %v169
    %171 = vmatprep.subr.mxu0 0.0
    %v172 = vand.u32 %v53, 4294901760
    %173 = vmatpush1.msra.mxu0 %v172
    %174 = vmatprep.subr.mxu0 0.0
    %v175 = vand.u32 %v54, 4294901760
    %176 = vmatpush1.msra.mxu0 %v175
    %177 = vmatprep.subr.mxu0 0.0
    %178 = vmatpush1.msra.mxu0 0.0
    %179 = vmatprep.subr.mxu0 0.0
    %180 = vmatpush1.msra.mxu0 0.0
    %181 = vmatprep.subr.mxu0 0.0
    %182 = vmatpush1.msra.mxu0 0.0
    %183 = vmatprep.subr.mxu0 0.0
    %184 = vmatpush1.msra.mxu0 0.0
    %185 = vmatprep.subr.mxu0 0.0
    %186 = vmatpush1.msra.mxu0 0.0
    %187 = vmatprep.subr.mxu0 0.0
    %188 = vmatpush1.msra.mxu0 0.0
    %189 = vmatprep.subr.mxu0 0.0
    %190 = vmatpush1.msra.mxu0 0.0
    %191 = vmatprep.subr.mxu0 0.0
    %192 = vmatpush1.msra.mxu0 0.0
    %193 = vmatprep.subr.mxu0 0.0
    %194 = vmatpush1.msra.mxu0 0.0
    %195 = vmatprep.subr.mxu0 0.0
    %196 = vmatpush1.msra.mxu0 0.0
    %197 = vmatprep.subr.mxu0 0.0
    %198 = vmatpush1.msra.mxu0 0.0
    %199 = vmatprep.subr.mxu0 0.0
    %200 = vmatpush1.msra.mxu0 0.0
    %201 = vmatprep.subr.mxu0 0.0
    %202 = vmatpush1.msra.mxu0 0.0
    %203 = vmatprep.subr.mxu0 0.0
    %204 = vmatpush1.msra.mxu0 0.0
    %205 = vmatprep.subr.mxu0 0.0
    %206 = vmatpush1.msra.mxu0 0.0
    %207 = vmatprep.subr.mxu0 0.0
    %208 = vmatpush1.msra.mxu0 0.0
    %209 = vmatprep.mubr.f32.mxu0 0.0
    %v210 = vand.u32 %v127, 4294901760
    %v211 = vsub.f32 %v127, %v210
    %v212 = vand.u32 %v211, 4294901760
    %v213 = vsub.f32 %v211, %v212
    %v214 = vand.u32 %v213, 4294901760
    %215 = vmatmul.mubr.f32.gmra.mrb[0].mxu0 %v214
    %v216 = vpop.f32.mrb[0].mxu0
    %v217 = vadd.f32 %v128, %v216
    %v218 = vpop.f32.mrb[0].mxu0
    %219 = vdwg.mxu0
    %220 = vmatprep.subr.mxu0 0.0
    %v221 = vand.u32 %v39, 4294901760
    %v222 = vsub.f32 %v39, %v221
    %v223 = vand.u32 %v222, 4294901760
    %v224 = vsub.f32 %v222, %v223
    %v225 = vand.u32 %v224, 4294901760
    %226 = vmatpush1.msra.mxu0 %v225
    %227 = vmatprep.subr.mxu0 0.0
    %v228 = vand.u32 %v40, 4294901760
    %v229 = vsub.f32 %v40, %v228
    %v230 = vand.u32 %v229, 4294901760
    %v231 = vsub.f32 %v229, %v230
    %v232 = vand.u32 %v231, 4294901760
    %233 = vmatpush1.msra.mxu0 %v232
    %234 = vmatprep.subr.mxu0 0.0
    %v235 = vand.u32 %v41, 4294901760
    %v236 = vsub.f32 %v41, %v235
    %v237 = vand.u32 %v236, 4294901760
    %v238 = vsub.f32 %v236, %v237
    %v239 = vand.u32 %v238, 4294901760
    %240 = vmatpush1.msra.mxu0 %v239
    %241 = vmatprep.subr.mxu0 0.0
    %v242 = vand.u32 %v42, 4294901760
    %v243 = vsub.f32 %v42, %v242
    %v244 = vand.u32 %v243, 4294901760
    %v245 = vsub.f32 %v243, %v244
    %v246 = vand.u32 %v245, 4294901760
    %247 = vmatpush1.msra.mxu0 %v246
    %248 = vmatprep.subr.mxu0 0.0
    %v249 = vand.u32 %v43, 4294901760
    %v250 = vsub.f32 %v43, %v249
    %v251 = vand.u32 %v250, 4294901760
    %v252 = vsub.f32 %v250, %v251
    %v253 = vand.u32 %v252, 4294901760
    %254 = vmatpush1.msra.mxu0 %v253
    %255 = vmatprep.subr.mxu0 0.0
    %v256 = vand.u32 %v44, 4294901760
    %v257 = vsub.f32 %v44, %v256
    %v258 = vand.u32 %v257, 4294901760
    %v259 = vsub.f32 %v257, %v258
    %v260 = vand.u32 %v259, 4294901760
    %261 = vmatpush1.msra.mxu0 %v260
    %262 = vmatprep.subr.mxu0 0.0
    %v263 = vand.u32 %v45, 4294901760
    %v264 = vsub.f32 %v45, %v263
    %v265 = vand.u32 %v264, 4294901760
    %v266 = vsub.f32 %v264, %v265
    %v267 = vand.u32 %v266, 4294901760
    %268 = vmatpush1.msra.mxu0 %v267
    %269 = vmatprep.subr.mxu0 0.0
    %v270 = vand.u32 %v46, 4294901760
    %v271 = vsub.f32 %v46, %v270
    %v272 = vand.u32 %v271, 4294901760
    %v273 = vsub.f32 %v271, %v272
    %v274 = vand.u32 %v273, 4294901760
    %275 = vmatpush1.msra.mxu0 %v274
    %276 = vmatprep.subr.mxu0 0.0
    %v277 = vand.u32 %v47, 4294901760
    %v278 = vsub.f32 %v47, %v277
    %v279 = vand.u32 %v278, 4294901760
    %v280 = vsub.f32 %v278, %v279
    %v281 = vand.u32 %v280, 4294901760
    %282 = vmatpush1.msra.mxu0 %v281
    %283 = vmatprep.subr.mxu0 0.0
    %v284 = vand.u32 %v48, 4294901760
    %v285 = vsub.f32 %v48, %v284
    %v286 = vand.u32 %v285, 4294901760
    %v287 = vsub.f32 %v285, %v286
    %v288 = vand.u32 %v287, 4294901760
    %289 = vmatpush1.msra.mxu0 %v288
    %290 = vmatprep.subr.mxu0 0.0
    %v291 = vand.u32 %v49, 4294901760
    %v292 = vsub.f32 %v49, %v291
    %v293 = vand.u32 %v292, 4294901760
    %v294 = vsub.f32 %v292, %v293
    %v295 = vand.u32 %v294, 4294901760
    %296 = vmatpush1.msra.mxu0 %v295
    %297 = vmatprep.subr.mxu0 0.0
    %v298 = vand.u32 %v50, 4294901760
    %v299 = vsub.f32 %v50, %v298
    %v300 = vand.u32 %v299, 4294901760
    %v301 = vsub.f32 %v299, %v300
    %v302 = vand.u32 %v301, 4294901760
    %303 = vmatpush1.msra.mxu0 %v302
    %304 = vmatprep.subr.mxu0 0.0
    %v305 = vand.u32 %v51, 4294901760
    %v306 = vsub.f32 %v51, %v305
    %v307 = vand.u32 %v306, 4294901760
    %v308 = vsub.f32 %v306, %v307
    %v309 = vand.u32 %v308, 4294901760
    %310 = vmatpush1.msra.mxu0 %v309
    %311 = vmatprep.subr.mxu0 0.0
    %v312 = vand.u32 %v52, 4294901760
    %v313 = vsub.f32 %v52, %v312
    %v314 = vand.u32 %v313, 4294901760
    %v315 = vsub.f32 %v313, %v314
    %v316 = vand.u32 %v315, 4294901760
    %317 = vmatpush1.msra.mxu0 %v316
    %318 = vmatprep.subr.mxu0 0.0
    %v319 = vand.u32 %v53, 4294901760
    %v320 = vsub.f32 %v53, %v319
    %v321 = vand.u32 %v320, 4294901760
    %v322 = vsub.f32 %v320, %v321
    %v323 = vand.u32 %v322, 4294901760
    %324 = vmatpush1.msra.mxu0 %v323
    %325 = vmatprep.subr.mxu0 0.0
    %v326 = vand.u32 %v54, 4294901760
    %v327 = vsub.f32 %v54, %v326
    %v328 = vand.u32 %v327, 4294901760
    %v329 = vsub.f32 %v327, %v328
    %v330 = vand.u32 %v329, 4294901760
    %331 = vmatpush1.msra.mxu0 %v330
    %332 = vmatprep.subr.mxu0 0.0
    %333 = vmatpush1.msra.mxu0 0.0
    %334 = vmatprep.subr.mxu0 0.0
    %335 = vmatpush1.msra.mxu0 0.0
    %336 = vmatprep.subr.mxu0 0.0
    %337 = vmatpush1.msra.mxu0 0.0
    %338 = vmatprep.subr.mxu0 0.0
    %339 = vmatpush1.msra.mxu0 0.0
    %340 = vmatprep.subr.mxu0 0.0
    %341 = vmatpush1.msra.mxu0 0.0
    %342 = vmatprep.subr.mxu0 0.0
    %343 = vmatpush1.msra.mxu0 0.0
    %344 = vmatprep.subr.mxu0 0.0
    %345 = vmatpush1.msra.mxu0 0.0
    %346 = vmatprep.subr.mxu0 0.0
    %347 = vmatpush1.msra.mxu0 0.0
    %348 = vmatprep.subr.mxu0 0.0
    %349 = vmatpush1.msra.mxu0 0.0
    %350 = vmatprep.subr.mxu0 0.0
    %351 = vmatpush1.msra.mxu0 0.0
    %352 = vmatprep.subr.mxu0 0.0
    %353 = vmatpush1.msra.mxu0 0.0
    %354 = vmatprep.subr.mxu0 0.0
    %355 = vmatpush1.msra.mxu0 0.0
    %356 = vmatprep.subr.mxu0 0.0
    %357 = vmatpush1.msra.mxu0 0.0
    %358 = vmatprep.subr.mxu0 0.0
    %359 = vmatpush1.msra.mxu0 0.0
    %360 = vmatprep.subr.mxu0 0.0
    %361 = vmatpush1.msra.mxu0 0.0
    %362 = vmatprep.subr.mxu0 0.0
    %363 = vmatpush1.msra.mxu0 0.0
    %364 = vmatprep.mubr.f32.mxu0 0.0
    %v365 = vand.u32 %v127, 4294901760
    %366 = vmatmul.mubr.f32.gmra.mrb[0].mxu0 %v365
    %v367 = vpop.f32.mrb[0].mxu0
    %v368 = vadd.f32 %v217, %v367
    %v369 = vpop.f32.mrb[0].mxu0
    %370 = vdwg.mxu0
    %371 = vmatprep.subr.mxu0 0.0
    %v372 = vand.u32 %v39, 4294901760
    %v373 = vsub.f32 %v39, %v372
    %374 = vmatpush1.msra.mxu0 %v373
    %375 = vmatprep.subr.mxu0 0.0
    %v376 = vand.u32 %v40, 4294901760
    %v377 = vsub.f32 %v40, %v376
    %378 = vmatpush1.msra.mxu0 %v377
    %379 = vmatprep.subr.mxu0 0.0
    %v380 = vand.u32 %v41, 4294901760
    %v381 = vsub.f32 %v41, %v380
    %382 = vmatpush1.msra.mxu0 %v381
    %383 = vmatprep.subr.mxu0 0.0
    %v384 = vand.u32 %v42, 4294901760
    %v385 = vsub.f32 %v42, %v384
    %386 = vmatpush1.msra.mxu0 %v385
    %387 = vmatprep.subr.mxu0 0.0
    %v388 = vand.u32 %v43, 4294901760
    %v389 = vsub.f32 %v43, %v388
    %390 = vmatpush1.msra.mxu0 %v389
    %391 = vmatprep.subr.mxu0 0.0
    %v392 = vand.u32 %v44, 4294901760
    %v393 = vsub.f32 %v44, %v392
    %394 = vmatpush1.msra.mxu0 %v393
    %395 = vmatprep.subr.mxu0 0.0
    %v396 = vand.u32 %v45, 4294901760
    %v397 = vsub.f32 %v45, %v396
    %398 = vmatpush1.msra.mxu0 %v397
    %399 = vmatprep.subr.mxu0 0.0
    %v400 = vand.u32 %v46, 4294901760
    %v401 = vsub.f32 %v46, %v400
    %402 = vmatpush1.msra.mxu0 %v401
    %403 = vmatprep.subr.mxu0 0.0
    %v404 = vand.u32 %v47, 4294901760
    %v405 = vsub.f32 %v47, %v404
    %406 = vmatpush1.msra.mxu0 %v405
    %407 = vmatprep.subr.mxu0 0.0
    %v408 = vand.u32 %v48, 4294901760
    %v409 = vsub.f32 %v48, %v408
    %410 = vmatpush1.msra.mxu0 %v409
    %411 = vmatprep.subr.mxu0 0.0
    %v412 = vand.u32 %v49, 4294901760
    %v413 = vsub.f32 %v49, %v412
    %414 = vmatpush1.msra.mxu0 %v413
    %415 = vmatprep.subr.mxu0 0.0
    %v416 = vand.u32 %v50, 4294901760
    %v417 = vsub.f32 %v50, %v416
    %418 = vmatpush1.msra.mxu0 %v417
    %419 = vmatprep.subr.mxu0 0.0
    %v420 = vand.u32 %v51, 4294901760
    %v421 = vsub.f32 %v51, %v420
    %422 = vmatpush1.msra.mxu0 %v421
    %423 = vmatprep.subr.mxu0 0.0
    %v424 = vand.u32 %v52, 4294901760
    %v425 = vsub.f32 %v52, %v424
    %426 = vmatpush1.msra.mxu0 %v425
    %427 = vmatprep.subr.mxu0 0.0
    %v428 = vand.u32 %v53, 4294901760
    %v429 = vsub.f32 %v53, %v428
    %430 = vmatpush1.msra.mxu0 %v429
    %431 = vmatprep.subr.mxu0 0.0
    %v432 = vand.u32 %v54, 4294901760
    %v433 = vsub.f32 %v54, %v432
    %434 = vmatpush1.msra.mxu0 %v433
    %435 = vmatprep.subr.mxu0 0.0
    %436 = vmatpush1.msra.mxu0 0.0
    %437 = vmatprep.subr.mxu0 0.0
    %438 = vmatpush1.msra.mxu0 0.0
    %439 = vmatprep.subr.mxu0 0.0
    %440 = vmatpush1.msra.mxu0 0.0
    %441 = vmatprep.subr.mxu0 0.0
    %442 = vmatpush1.msra.mxu0 0.0
    %443 = vmatprep.subr.mxu0 0.0
    %444 = vmatpush1.msra.mxu0 0.0
    %445 = vmatprep.subr.mxu0 0.0
    %446 = vmatpush1.msra.mxu0 0.0
    %447 = vmatprep.subr.mxu0 0.0
    %448 = vmatpush1.msra.mxu0 0.0
    %449 = vmatprep.subr.mxu0 0.0
    %450 = vmatpush1.msra.mxu0 0.0
    %451 = vmatprep.subr.mxu0 0.0
    %452 = vmatpush1.msra.mxu0 0.0
    %453 = vmatprep.subr.mxu0 0.0
    %454 = vmatpush1.msra.mxu0 0.0
    %455 = vmatprep.subr.mxu0 0.0
    %456 = vmatpush1.msra.mxu0 0.0
    %457 = vmatprep.subr.mxu0 0.0
    %458 = vmatpush1.msra.mxu0 0.0
    %459 = vmatprep.subr.mxu0 0.0
    %460 = vmatpush1.msra.mxu0 0.0
    %461 = vmatprep.subr.mxu0 0.0
    %462 = vmatpush1.msra.mxu0 0.0
    %463 = vmatprep.subr.mxu0 0.0
    %464 = vmatpush1.msra.mxu0 0.0
    %465 = vmatprep.subr.mxu0 0.0
    %466 = vmatpush1.msra.mxu0 0.0
    %467 = vmatprep.mubr.f32.mxu0 0.0
    %v468 = vand.u32 %v127, 4294901760
    %v469 = vsub.f32 %v127, %v468
    %470 = vmatmul.mubr.f32.gmra.mrb[0].mxu0 %v469
    %v471 = vpop.f32.mrb[0].mxu0
    %v472 = vadd.f32 %v368, %v471
    %v473 = vpop.f32.mrb[0].mxu0
    %474 = vdwg.mxu0
    %475 = vmatprep.subr.mxu0 0.0
    %v476 = vand.u32 %v39, 4294901760
    %477 = vmatpush1.msra.mxu0 %v476
    %478 = vmatprep.subr.mxu0 0.0
    %v479 = vand.u32 %v40, 4294901760
    %480 = vmatpush1.msra.mxu0 %v479
    %481 = vmatprep.subr.mxu0 0.0
    %v482 = vand.u32 %v41, 4294901760
    %483 = vmatpush1.msra.mxu0 %v482
    %484 = vmatprep.subr.mxu0 0.0
    %v485 = vand.u32 %v42, 4294901760
    %486 = vmatpush1.msra.mxu0 %v485
    %487 = vmatprep.subr.mxu0 0.0
    %v488 = vand.u32 %v43, 4294901760
    %489 = vmatpush1.msra.mxu0 %v488
    %490 = vmatprep.subr.mxu0 0.0
    %v491 = vand.u32 %v44, 4294901760
    %492 = vmatpush1.msra.mxu0 %v491
    %493 = vmatprep.subr.mxu0 0.0
    %v494 = vand.u32 %v45, 4294901760
    %495 = vmatpush1.msra.mxu0 %v494
    %496 = vmatprep.subr.mxu0 0.0
    %v497 = vand.u32 %v46, 4294901760
    %498 = vmatpush1.msra.mxu0 %v497
    %499 = vmatprep.subr.mxu0 0.0
    %v500 = vand.u32 %v47, 4294901760
    %501 = vmatpush1.msra.mxu0 %v500
    %502 = vmatprep.subr.mxu0 0.0
    %v503 = vand.u32 %v48, 4294901760
    %504 = vmatpush1.msra.mxu0 %v503
    %505 = vmatprep.subr.mxu0 0.0
    %v506 = vand.u32 %v49, 4294901760
    %507 = vmatpush1.msra.mxu0 %v506
    %508 = vmatprep.subr.mxu0 0.0
    %v509 = vand.u32 %v50, 4294901760
    %510 = vmatpush1.msra.mxu0 %v509
    %511 = vmatprep.subr.mxu0 0.0
    %v512 = vand.u32 %v51, 4294901760
    %513 = vmatpush1.msra.mxu0 %v512
    %514 = vmatprep.subr.mxu0 0.0
    %v515 = vand.u32 %v52, 4294901760
    %516 = vmatpush1.msra.mxu0 %v515
    %517 = vmatprep.subr.mxu0 0.0
    %v518 = vand.u32 %v53, 4294901760
    %519 = vmatpush1.msra.mxu0 %v518
    %520 = vmatprep.subr.mxu0 0.0
    %v521 = vand.u32 %v54, 4294901760
    %522 = vmatpush1.msra.mxu0 %v521
    %523 = vmatprep.subr.mxu0 0.0
    %524 = vmatpush1.msra.mxu0 0.0
    %525 = vmatprep.subr.mxu0 0.0
    %526 = vmatpush1.msra.mxu0 0.0
    %527 = vmatprep.subr.mxu0 0.0
    %528 = vmatpush1.msra.mxu0 0.0
    %529 = vmatprep.subr.mxu0 0.0
    %530 = vmatpush1.msra.mxu0 0.0
    %531 = vmatprep.subr.mxu0 0.0
    %532 = vmatpush1.msra.mxu0 0.0
    %533 = vmatprep.subr.mxu0 0.0
    %534 = vmatpush1.msra.mxu0 0.0
    %535 = vmatprep.subr.mxu0 0.0
    %536 = vmatpush1.msra.mxu0 0.0
    %537 = vmatprep.subr.mxu0 0.0
    %538 = vmatpush1.msra.mxu0 0.0
    %539 = vmatprep.subr.mxu0 0.0
    %540 = vmatpush1.msra.mxu0 0.0
    %541 = vmatprep.subr.mxu0 0.0
    %542 = vmatpush1.msra.mxu0 0.0
    %543 = vmatprep.subr.mxu0 0.0
    %544 = vmatpush1.msra.mxu0 0.0
    %545 = vmatprep.subr.mxu0 0.0
    %546 = vmatpush1.msra.mxu0 0.0
    %547 = vmatprep.subr.mxu0 0.0
    %548 = vmatpush1.msra.mxu0 0.0
    %549 = vmatprep.subr.mxu0 0.0
    %550 = vmatpush1.msra.mxu0 0.0
    %551 = vmatprep.subr.mxu0 0.0
    %552 = vmatpush1.msra.mxu0 0.0
    %553 = vmatprep.subr.mxu0 0.0
    %554 = vmatpush1.msra.mxu0 0.0
    %555 = vmatprep.mubr.f32.mxu0 0.0
    %v556 = vand.u32 %v127, 4294901760
    %v557 = vsub.f32 %v127, %v556
    %v558 = vand.u32 %v557, 4294901760
    %559 = vmatmul.mubr.f32.gmra.mrb[0].mxu0 %v558
    %v560 = vpop.f32.mrb[0].mxu0
    %v561 = vadd.f32 %v472, %v560
    %v562 = vpop.f32.mrb[0].mxu0
    %563 = vdwg.mxu0
    %564 = vmatprep.subr.mxu0 0.0
    %v565 = vand.u32 %v39, 4294901760
    %v566 = vsub.f32 %v39, %v565
    %v567 = vand.u32 %v566, 4294901760
    %568 = vmatpush1.msra.mxu0 %v567
    %569 = vmatprep.subr.mxu0 0.0
    %v570 = vand.u32 %v40, 4294901760
    %v571 = vsub.f32 %v40, %v570
    %v572 = vand.u32 %v571, 4294901760
    %573 = vmatpush1.msra.mxu0 %v572
    %574 = vmatprep.subr.mxu0 0.0
    %v575 = vand.u32 %v41, 4294901760
    %v576 = vsub.f32 %v41, %v575
    %v577 = vand.u32 %v576, 4294901760
    %578 = vmatpush1.msra.mxu0 %v577
    %579 = vmatprep.subr.mxu0 0.0
    %v580 = vand.u32 %v42, 4294901760
    %v581 = vsub.f32 %v42, %v580
    %v582 = vand.u32 %v581, 4294901760
    %583 = vmatpush1.msra.mxu0 %v582
    %584 = vmatprep.subr.mxu0 0.0
    %v585 = vand.u32 %v43, 4294901760
    %v586 = vsub.f32 %v43, %v585
    %v587 = vand.u32 %v586, 4294901760
    %588 = vmatpush1.msra.mxu0 %v587
    %589 = vmatprep.subr.mxu0 0.0
    %v590 = vand.u32 %v44, 4294901760
    %v591 = vsub.f32 %v44, %v590
    %v592 = vand.u32 %v591, 4294901760
    %593 = vmatpush1.msra.mxu0 %v592
    %594 = vmatprep.subr.mxu0 0.0
    %v595 = vand.u32 %v45, 4294901760
    %v596 = vsub.f32 %v45, %v595
    %v597 = vand.u32 %v596, 4294901760
    %598 = vmatpush1.msra.mxu0 %v597
    %599 = vmatprep.subr.mxu0 0.0
    %v600 = vand.u32 %v46, 4294901760
    %v601 = vsub.f32 %v46, %v600
    %v602 = vand.u32 %v601, 4294901760
    %603 = vmatpush1.msra.mxu0 %v602
    %604 = vmatprep.subr.mxu0 0.0
    %v605 = vand.u32 %v47, 4294901760
    %v606 = vsub.f32 %v47, %v605
    %v607 = vand.u32 %v606, 4294901760
    %608 = vmatpush1.msra.mxu0 %v607
    %609 = vmatprep.subr.mxu0 0.0
    %v610 = vand.u32 %v48, 4294901760
    %v611 = vsub.f32 %v48, %v610
    %v612 = vand.u32 %v611, 4294901760
    %613 = vmatpush1.msra.mxu0 %v612
    %614 = vmatprep.subr.mxu0 0.0
    %v615 = vand.u32 %v49, 4294901760
    %v616 = vsub.f32 %v49, %v615
    %v617 = vand.u32 %v616, 4294901760
    %618 = vmatpush1.msra.mxu0 %v617
    %619 = vmatprep.subr.mxu0 0.0
    %v620 = vand.u32 %v50, 4294901760
    %v621 = vsub.f32 %v50, %v620
    %v622 = vand.u32 %v621, 4294901760
    %623 = vmatpush1.msra.mxu0 %v622
    %624 = vmatprep.subr.mxu0 0.0
    %v625 = vand.u32 %v51, 4294901760
    %v626 = vsub.f32 %v51, %v625
    %v627 = vand.u32 %v626, 4294901760
    %628 = vmatpush1.msra.mxu0 %v627
    %629 = vmatprep.subr.mxu0 0.0
    %v630 = vand.u32 %v52, 4294901760
    %v631 = vsub.f32 %v52, %v630
    %v632 = vand.u32 %v631, 4294901760
    %633 = vmatpush1.msra.mxu0 %v632
    %634 = vmatprep.subr.mxu0 0.0
    %v635 = vand.u32 %v53, 4294901760
    %v636 = vsub.f32 %v53, %v635
    %v637 = vand.u32 %v636, 4294901760
    %638 = vmatpush1.msra.mxu0 %v637
    %639 = vmatprep.subr.mxu0 0.0
    %v640 = vand.u32 %v54, 4294901760
    %v641 = vsub.f32 %v54, %v640
    %v642 = vand.u32 %v641, 4294901760
    %643 = vmatpush1.msra.mxu0 %v642
    %644 = vmatprep.subr.mxu0 0.0
    %645 = vmatpush1.msra.mxu0 0.0
    %646 = vmatprep.subr.mxu0 0.0
    %647 = vmatpush1.msra.mxu0 0.0
    %648 = vmatprep.subr.mxu0 0.0
    %649 = vmatpush1.msra.mxu0 0.0
    %650 = vmatprep.subr.mxu0 0.0
    %651 = vmatpush1.msra.mxu0 0.0
    %652 = vmatprep.subr.mxu0 0.0
    %653 = vmatpush1.msra.mxu0 0.0
    %654 = vmatprep.subr.mxu0 0.0
    %655 = vmatpush1.msra.mxu0 0.0
    %656 = vmatprep.subr.mxu0 0.0
    %657 = vmatpush1.msra.mxu0 0.0
    %658 = vmatprep.subr.mxu0 0.0
    %659 = vmatpush1.msra.mxu0 0.0
    %660 = vmatprep.subr.mxu0 0.0
    %661 = vmatpush1.msra.mxu0 0.0
    %662 = vmatprep.subr.mxu0 0.0
    %663 = vmatpush1.msra.mxu0 0.0
    %664 = vmatprep.subr.mxu0 0.0
    %665 = vmatpush1.msra.mxu0 0.0
    %666 = vmatprep.subr.mxu0 0.0
    %667 = vmatpush1.msra.mxu0 0.0
    %668 = vmatprep.subr.mxu0 0.0
    %669 = vmatpush1.msra.mxu0 0.0
    %670 = vmatprep.subr.mxu0 0.0
    %671 = vmatpush1.msra.mxu0 0.0
    %672 = vmatprep.subr.mxu0 0.0
    %673 = vmatpush1.msra.mxu0 0.0
    %674 = vmatprep.subr.mxu0 0.0
    %675 = vmatpush1.msra.mxu0 0.0
    %676 = vmatprep.mubr.f32.mxu0 0.0
    %v677 = vand.u32 %v127, 4294901760
    %678 = vmatmul.mubr.f32.gmra.mrb[0].mxu0 %v677
    %v679 = vpop.f32.mrb[0].mxu0
    %v680 = vadd.f32 %v561, %v679
    %v681 = vpop.f32.mrb[0].mxu0
    %682 = vdwg.mxu0
    %683 = vmatprep.subr.mxu0 0.0
    %v684 = vand.u32 %v39, 4294901760
    %685 = vmatpush1.msra.mxu0 %v684
    %686 = vmatprep.subr.mxu0 0.0
    %v687 = vand.u32 %v40, 4294901760
    %688 = vmatpush1.msra.mxu0 %v687
    %689 = vmatprep.subr.mxu0 0.0
    %v690 = vand.u32 %v41, 4294901760
    %691 = vmatpush1.msra.mxu0 %v690
    %692 = vmatprep.subr.mxu0 0.0
    %v693 = vand.u32 %v42, 4294901760
    %694 = vmatpush1.msra.mxu0 %v693
    %695 = vmatprep.subr.mxu0 0.0
    %v696 = vand.u32 %v43, 4294901760
    %697 = vmatpush1.msra.mxu0 %v696
    %698 = vmatprep.subr.mxu0 0.0
    %v699 = vand.u32 %v44, 4294901760
    %700 = vmatpush1.msra.mxu0 %v699
    %701 = vmatprep.subr.mxu0 0.0
    %v702 = vand.u32 %v45, 4294901760
    %703 = vmatpush1.msra.mxu0 %v702
    %704 = vmatprep.subr.mxu0 0.0
    %v705 = vand.u32 %v46, 4294901760
    %706 = vmatpush1.msra.mxu0 %v705
    %707 = vmatprep.subr.mxu0 0.0
    %v708 = vand.u32 %v47, 4294901760
    %709 = vmatpush1.msra.mxu0 %v708
    %710 = vmatprep.subr.mxu0 0.0
    %v711 = vand.u32 %v48, 4294901760
    %712 = vmatpush1.msra.mxu0 %v711
    %713 = vmatprep.subr.mxu0 0.0
    %v714 = vand.u32 %v49, 4294901760
    %715 = vmatpush1.msra.mxu0 %v714
    %716 = vmatprep.subr.mxu0 0.0
    %v717 = vand.u32 %v50, 4294901760
    %718 = vmatpush1.msra.mxu0 %v717
    %719 = vmatprep.subr.mxu0 0.0
    %v720 = vand.u32 %v51, 4294901760
    %721 = vmatpush1.msra.mxu0 %v720
    %722 = vmatprep.subr.mxu0 0.0
    %v723 = vand.u32 %v52, 4294901760
    %724 = vmatpush1.msra.mxu0 %v723
    %725 = vmatprep.subr.mxu0 0.0
    %v726 = vand.u32 %v53, 4294901760
    %727 = vmatpush1.msra.mxu0 %v726
    %728 = vmatprep.subr.mxu0 0.0
    %v729 = vand.u32 %v54, 4294901760
    %730 = vmatpush1.msra.mxu0 %v729
    %731 = vmatprep.subr.mxu0 0.0
    %732 = vmatpush1.msra.mxu0 0.0
    %733 = vmatprep.subr.mxu0 0.0
    %734 = vmatpush1.msra.mxu0 0.0
    %735 = vmatprep.subr.mxu0 0.0
    %736 = vmatpush1.msra.mxu0 0.0
    %737 = vmatprep.subr.mxu0 0.0
    %738 = vmatpush1.msra.mxu0 0.0
    %739 = vmatprep.subr.mxu0 0.0
    %740 = vmatpush1.msra.mxu0 0.0
    %741 = vmatprep.subr.mxu0 0.0
    %742 = vmatpush1.msra.mxu0 0.0
    %743 = vmatprep.subr.mxu0 0.0
    %744 = vmatpush1.msra.mxu0 0.0
    %745 = vmatprep.subr.mxu0 0.0
    %746 = vmatpush1.msra.mxu0 0.0
    %747 = vmatprep.subr.mxu0 0.0
    %748 = vmatpush1.msra.mxu0 0.0
    %749 = vmatprep.subr.mxu0 0.0
    %750 = vmatpush1.msra.mxu0 0.0
    %751 = vmatprep.subr.mxu0 0.0
    %752 = vmatpush1.msra.mxu0 0.0
    %753 = vmatprep.subr.mxu0 0.0
    %754 = vmatpush1.msra.mxu0 0.0
    %755 = vmatprep.subr.mxu0 0.0
    %756 = vmatpush1.msra.mxu0 0.0
    %757 = vmatprep.subr.mxu0 0.0
    %758 = vmatpush1.msra.mxu0 0.0
    %759 = vmatprep.subr.mxu0 0.0
    %760 = vmatpush1.msra.mxu0 0.0
    %761 = vmatprep.subr.mxu0 0.0
    %762 = vmatpush1.msra.mxu0 0.0
    %763 = vmatprep.mubr.f32.mxu0 0.0
    %v764 = vand.u32 %v127, 4294901760
    %765 = vmatmul.mubr.f32.gmra.mrb[0].mxu0 %v764
    %v766 = vpop.f32.mrb[0].mxu0
    %v767 = vadd.f32 %v680, %v766
    %v768 = vpop.f32.mrb[0].mxu0
    %769 = vdwg.mxu0
    %vm770 = vcmask 122880
    %771 = vst.msk [vmem:[#allocation3] sm:$0x1] %vm770, %v767
    // Predicated region
    $region22: #{tpu_custom_call.1} parent=1 // pred_check
      _
    $region23: #{tpu_custom_call.1} parent=1 // pred_check_branch
      %773 = sbr.rel (0) target = $region25
    $region24: #{tpu_custom_call.1} parent=1 // pred_region
      %s775 = ssub.s32 16, 16
      %776 = vsyncadd [#allocation4], %s775
      %s778 = sshll.u32 [#allocation3], 4
      %s779 = int_to_ptr.vmem [resolvable:$true] %s778
      %781 = dma.vmem_to_hbm [thread:$0]  %s779, 16, %s5, [#allocation4]
    $region25: #{tpu_custom_call.1} parent=1 // pred_fallthru
      _
    // Predicated region
    $region26: #{tpu_custom_call.1} parent=1 // pred_check
      _
    $region27: #{tpu_custom_call.1} parent=1 // pred_check_branch
      %783 = sbr.rel (0) target = $region29
    $region28: #{tpu_custom_call.1} parent=1 // pred_region
      %784 = dma.done [#allocation4], 16
    $region29: #{tpu_custom_call.1} parent=1 // pred_fallthru
      _
    %785 = vsyncpa [#allocation4], 1

</llo_original>
